<compile_context>
chip_gen: v5e
topology: v5e:2x2
jax: 0.10.0
libtpu: 0.0.40
codegen_flags: <defaults>
</compile_context>

<pallas_src>
import jax
import jax.numpy as jnp
from jax.experimental import pallas as pl
from jax.experimental.pallas import tpu as pltpu


def _round_up(x: int, m: int) -> int:
    return ((x + m - 1) // m) * m


def _vmem_capacity_bytes() -> int:
    """Per-core VMEM capacity (chip-aware; conservative fallback = v7x 64 MiB/TC)."""
    try:
        info = pltpu.get_tpu_info()
        cap = int(getattr(info, "vmem_capacity_bytes", 0) or 0)
        if cap > 0:
            return cap
    except Exception:
        pass
    return 64 << 20


# --------------------------------------------------------------------------
# prologue kernel:  h = RMSNorm(SiLU(x @ W1 + b1)) * gamma   (K-tiled over H)
# --------------------------------------------------------------------------
def _make_prologue_kernel(eps: float):
    def kernel(x_ref, w1_ref, b1_ref, gamma_ref, h_ref, acc_ref):
        k = pl.program_id(1)

        @pl.when(k == 0)
        def _():
            acc_ref[...] = jnp.zeros_like(acc_ref)

        # bf16/f32 operands, f32 accumulation on the MXU.
        acc_ref[...] += jnp.dot(x_ref[...], w1_ref[...],
                                preferred_element_type=jnp.float32)

        @pl.when(k == pl.num_programs(1) - 1)
        def _():
            h = acc_ref[...] + b1_ref[...].astype(jnp.float32)   # (1, H) broadcast
            h = h * jax.nn.sigmoid(h)                            # SiLU (EUP)
            var = jnp.mean(h * h, axis=-1, keepdims=True)        # RMSNorm in f32
            h = h * jax.lax.rsqrt(var + eps)
            h = h * gamma_ref[...].astype(jnp.float32)
            h_ref[...] = h.astype(h_ref.dtype)

    return kernel


# --------------------------------------------------------------------------
# decoder kernel:  logits = h @ W2   (tiled GEMM, full H as the K dim)
# --------------------------------------------------------------------------
def _decoder_kernel(h_ref, w2_ref, o_ref):
    o_ref[...] = jnp.dot(h_ref[...], w2_ref[...],
                         preferred_element_type=jnp.float32).astype(o_ref.dtype)


def cross_modal_mlm_head(hidden_states, w1, b1, gamma, w2, *,
                         eps: float = 1e-6, tm=None, tv=None,
                         matmul_dtype=None, out_dtype=None):
    """
    hidden_states: (B, N, H)
    w1:    (H, H)   dense weight (applied as x @ w1, i.e. PyTorch W.T)
    b1:    (H,)     dense bias
    gamma: (H,)     RMSNorm scale
    w2:    (H, V)   decoder weight (applied as h @ w2), no bias
    returns logits: (B, N, V) in `out_dtype` (defaults to hidden_states.dtype)
    """
    B, N, H = hidden_states.shape
    V = w2.shape[1]
    M = B * N

    in_dtype = hidden_states.dtype
    if out_dtype is None:
        out_dtype = in_dtype
    if matmul_dtype is None:
        # Production-sized f32 models: run the MXU on bf16 operands with f32
        # accumulation (halves W2 HBM traffic and VMEM footprint).  Small /
        # test shapes keep the input dtype so f32 checks stay tight.
        if jnp.dtype(in_dtype) == jnp.dtype(jnp.float32) and H >= 2048:
            matmul_dtype = jnp.bfloat16
        else:
            matmul_dtype = in_dtype
    matmul_dtype = jnp.dtype(matmul_dtype)
    mbytes = matmul_dtype.itemsize
    obytes = jnp.dtype(out_dtype).itemsize

    cap = _vmem_capacity_bytes()
    budget = cap - (8 << 20)          # leave headroom below physical VMEM

    # ---------------- decoder tiling (the arithmetic-intensity knob) --------
    tm_d = 1024 if tm is None else tm
    tm_d = max(16, min(_round_up(tm_d, 16), _round_up(M, 16)))
    tv_d = 1024 if tv is None else tv
    tv_d = max(128, min(_round_up(tv_d, 128), _round_up(V, 128)))

    def dec_vmem(tm_, tv_):
        return (2 * tm_ * H * mbytes       # h rows   (double-buffered)
                + 2 * H * tv_ * mbytes     # W2 block (double-buffered)
                + 2 * tm_ * tv_ * obytes)  # out block

    while dec_vmem(tm_d, tv_d) > budget and tv_d > 128:
        tv_d = max(128, _round_up(tv_d // 2, 128))
    while dec_vmem(tm_d, tv_d) > budget and tm_d >= 32 and (tm_d // 2) % 8 == 0:
        tm_d //= 2

    M_pad = _round_up(M, tm_d)
    V_pad = _round_up(V, tv_d)

    # ---------------- prologue tiling (K-tile W1 so it is never resident) ---
    tk = H
    for cand in (512, 256, 128):
        if H > cand and H % cand == 0:
            tk = cand
            break

    tm_p = tm_d                      # halved below only in divisors of tm_d
    def pro_vmem(tm_, tk_):
        return (2 * tm_ * tk_ * mbytes     # x block
                + 2 * tk_ * H * mbytes     # W1 K-slice
                + 4 * H * mbytes           # bias + gamma (tiny)
                + 2 * tm_ * H * mbytes     # h out block
                + tm_ * H * 4)             # f32 accumulator scratch
    while pro_vmem(tm_p, tk) > budget:
        if tk > 128 and H % (tk // 2) == 0:
            tk //= 2
        elif tm_p >= 32 and (tm_p // 2) % 8 == 0:
            tm_p //= 2
        else:
            break

    # ---------------- wrapper-side layout / padding --------------------------
    x2d = hidden_states.reshape(M, H).astype(matmul_dtype)
    w1 = jnp.asarray(w1, matmul_dtype)
    b1 = jnp.asarray(b1, matmul_dtype).reshape(1, H)
    gamma = jnp.asarray(gamma, matmul_dtype).reshape(1, H)
    w2 = jnp.asarray(w2, matmul_dtype)

    if M_pad != M:
        x2d = jnp.pad(x2d, ((0, M_pad - M), (0, 0)))
    if V_pad != V:
        w2 = jnp.pad(w2, ((0, 0), (0, V_pad - V)))   # zero logits, sliced off

    # ---------------- call 1: dense + SiLU + RMSNorm -------------------------
    n_row_p = M_pad // tm_p
    n_k = H // tk
    pro_limit = min(cap - (2 << 20),
                    max(int(pro_vmem(tm_p, tk) * 1.25) + (1 << 20), 32 << 20))

    h = pl.pallas_call(
        _make_prologue_kernel(float(eps)),
        out_shape=jax.ShapeDtypeStruct((M_pad, H), matmul_dtype),
        grid_spec=pltpu.PrefetchScalarGridSpec(
            num_scalar_prefetch=0,
            grid=(n_row_p, n_k),
            in_specs=[
                pl.BlockSpec((tm_p, tk), lambda i, k: (i, k)),   # x rows / K slice
                pl.BlockSpec((tk, H), lambda i, k: (k, 0)),      # W1 K slice
                pl.BlockSpec((1, H), lambda i, k: (0, 0)),       # dense bias
                pl.BlockSpec((1, H), lambda i, k: (0, 0)),       # rmsnorm gamma
            ],
            out_specs=pl.BlockSpec((tm_p, H), lambda i, k: (i, 0)),
            scratch_shapes=[pltpu.VMEM((tm_p, H), jnp.float32)],
        ),
        compiler_params=pltpu.CompilerParams(
            dimension_semantics=("parallel", "arbitrary"),
            vmem_limit_bytes=int(pro_limit),
        ),
        cost_estimate=pl.CostEstimate(
            flops=2 * M_pad * H * H,
            transcendentals=2 * M_pad * H,
            bytes_accessed=(M_pad * H * mbytes
                            + n_row_p * H * H * mbytes
                            + M_pad * H * mbytes),
        ),
    )(x2d, w1, b1, gamma)

    # ---------------- call 2: decoder GEMM (h @ W2) ---------------------------
    n_row_d = M_pad // tm_d
    n_v = V_pad // tv_d
    dec_limit = min(cap - (2 << 20),
                    max(int(dec_vmem(tm_d, tv_d) * 1.25) + (1 << 20), 32 << 20))

    logits = pl.pallas_call(
        _decoder_kernel,
        out_shape=jax.ShapeDtypeStruct((M_pad, V_pad), out_dtype),
        grid_spec=pltpu.PrefetchScalarGridSpec(
            num_scalar_prefetch=0,
            grid=(n_row_d, n_v),
            in_specs=[
                pl.BlockSpec((tm_d, H), lambda i, j: (i, 0)),    # h rows (resident across j)
                pl.BlockSpec((H, tv_d), lambda i, j: (0, j)),    # W2 vocab slice
            ],
            out_specs=pl.BlockSpec((tm_d, tv_d), lambda i, j: (i, j)),
        ),
        compiler_params=pltpu.CompilerParams(
            dimension_semantics=("parallel", "arbitrary"),
            vmem_limit_bytes=int(dec_limit),
        ),
        cost_estimate=pl.CostEstimate(
            flops=2 * M_pad * H * V_pad,
            transcendentals=0,
            bytes_accessed=(M_pad * H * mbytes
                            + n_row_d * H * V_pad * mbytes
                            + M_pad * V_pad * obytes),
        ),
    )(h, w2)

    return logits[:M, :V].reshape(B, N, V)


def _reference(hidden_states, w1, b1, gamma, w2, eps=1e-6):
    x = hidden_states.astype(jnp.float32)
    h = x @ w1.astype(jnp.float32) + b1.astype(jnp.float32)
    h = h * jax.nn.sigmoid(h)
    var = jnp.mean(h * h, axis=-1, keepdims=True)
    h = h * jax.lax.rsqrt(var + eps)
    h = h * gamma.astype(jnp.float32)
    return h @ w2.astype(jnp.float32)


if __name__ == "__main__":
    # V=500 (not a multiple of 128) exercises the vocab-padding path.
    B, N, H, V = 2, 16, 32, 500

    key = jax.random.PRNGKey(0)
    k_x, k_w1, k_b1, k_w2 = jax.random.split(key, 4)

    hidden_states = jax.random.normal(k_x, (B, N, H), dtype=jnp.float32)
    w1 = jax.random.normal(k_w1, (H, H), dtype=jnp.float32) * (1.0 / H ** 0.5)
    b1 = jax.random.normal(k_b1, (H,), dtype=jnp.float32) * 0.01
    gamma = jnp.ones((H,), dtype=jnp.float32)           # RMSNorm weight init = ones
    w2 = jax.random.normal(k_w2, (H, V), dtype=jnp.float32) * (1.0 / H ** 0.5)

    ref = _reference(hidden_states, w1, b1, gamma, w2, eps=1e-6)

    # --- f32 path; tm=16 / tv=128 exercise multi-step row and vocab grids ----
    logits = cross_modal_mlm_head(hidden_states, w1, b1, gamma, w2,
                                  eps=1e-6, tm=16, tv=128,
                                  out_dtype=jnp.float32)
    logits = jax.block_until_ready(logits)
    assert logits.shape == (B, N, V)
    assert jnp.allclose(logits, ref, atol=1e-4, rtol=1e-4), "f32 mismatch vs reference"

    # --- bf16 path (bf16 operands, f32 MXU accumulation), auto tile sizes ----
    xb = hidden_states.astype(jnp.bfloat16)
    w1b = w1.astype(jnp.bfloat16)
    b1b = b1.astype(jnp.bfloat16)
    gb = gamma.astype(jnp.bfloat16)
    w2b = w2.astype(jnp.bfloat16)
    logits_bf16 = cross_modal_mlm_head(xb, w1b, b1b, gb, w2b, eps=1e-6)
    logits_bf16 = jax.block_until_ready(logits_bf16)
    ref_bf16 = _reference(xb.astype(jnp.float32), w1b.astype(jnp.float32),
                          b1b.astype(jnp.float32), gb.astype(jnp.float32),
                          w2b.astype(jnp.float32), eps=1e-6)
    assert logits_bf16.shape == (B, N, V)
    assert jnp.allclose(logits_bf16.astype(jnp.float32), ref_bf16,
                        atol=7.5e-2, rtol=5e-2), "bf16 mismatch vs reference"

    print("KERNEL_OK")
</pallas_src>

<mosaic_0001>
module attributes {stable_mosaic.version = 11 : i64} {
  func.func @kernel(%arg0: i32, %arg1: i32, %arg2: memref<16x32xf32, #tpu.memory_space<vmem>>, %arg3: memref<32x32xf32, #tpu.memory_space<vmem>>, %arg4: memref<1x32xf32, #tpu.memory_space<vmem>>, %arg5: memref<1x32xf32, #tpu.memory_space<vmem>>, %arg6: memref<16x32xf32, #tpu.memory_space<vmem>>, %arg7: memref<16x32xf32, #tpu.memory_space<vmem>>) attributes {dimension_semantics = [#tpu.dimension_semantics<parallel>, #tpu.dimension_semantics<arbitrary>], iteration_bounds = array<i64: 2, 1>, scalar_prefetch = 0 : i64, scratch_operands = 1 : i64, tpu.core_type = #tpu.core_type<tc>, window_params = [{transform_indices = @transform_0, window_bounds = array<i64: 16, 32>}, {transform_indices = @transform_1, window_bounds = array<i64: 32, 32>}, {pipeline_mode = #tpu.pipeline_mode<synchronous>, transform_indices = @transform_2, window_bounds = array<i64: 1, 32>}, {pipeline_mode = #tpu.pipeline_mode<synchronous>, transform_indices = @transform_3, window_bounds = array<i64: 1, 32>}, {transform_indices = @transform_4, window_bounds = array<i64: 16, 32>}]} {
    %c0_i32 = arith.constant 0 : i32
    %0 = arith.cmpi eq, %arg1, %c0_i32 : i32
    %1 = arith.extui %0 : i1 to i32
    %c0_i32_0 = arith.constant 0 : i32
    %2 = arith.cmpi ne, %1, %c0_i32_0 : i32
    scf.if %2 {
      %cst_10 = arith.constant 0.000000e+00 : f32
      %12 = vector.broadcast %cst_10 : f32 to vector<16x32xf32>
      %c0_11 = arith.constant 0 : index
      %c0_12 = arith.constant 0 : index
      %13 = vector.load %arg7[%c0_11, %c0_12] : memref<16x32xf32, #tpu.memory_space<vmem>>, vector<16x32xf32>
      tpu.vector_store %arg7[%c0_11, %c0_12], %12 {strides = array<i32>} : memref<16x32xf32, #tpu.memory_space<vmem>>, vector<16x32xf32>,
    } else {
    }
    %c0 = arith.constant 0 : index
    %c0_1 = arith.constant 0 : index
    %3 = vector.load %arg7[%c0, %c0_1] : memref<16x32xf32, #tpu.memory_space<vmem>>, vector<16x32xf32>
    %c0_2 = arith.constant 0 : index
    %c0_3 = arith.constant 0 : index
    %4 = vector.load %arg2[%c0_2, %c0_3] : memref<16x32xf32, #tpu.memory_space<vmem>>, vector<16x32xf32>
    %c0_4 = arith.constant 0 : index
    %c0_5 = arith.constant 0 : index
    %5 = vector.load %arg3[%c0_4, %c0_5] : memref<32x32xf32, #tpu.memory_space<vmem>>, vector<32x32xf32>
    %cst = arith.constant dense<0.000000e+00> : vector<16x32xf32>
    %6 = tpu.matmul %4, %5, %cst {dimension_numbers = #tpu.dot_dimension_numbers<[1], [0], [0], [1], [0, 0, 1, 1], [], []>} : vector<16x32xf32>, vector<32x32xf32>, vector<16x32xf32> -> vector<16x32xf32>
    %7 = arith.addf %3, %6 : vector<16x32xf32>
    %c0_6 = arith.constant 0 : index
    %c0_7 = arith.constant 0 : index
    %8 = vector.load %arg7[%c0_6, %c0_7] : memref<16x32xf32, #tpu.memory_space<vmem>>, vector<16x32xf32>
    tpu.vector_store %arg7[%c0_6, %c0_7], %7 {strides = array<i32>} : memref<16x32xf32, #tpu.memory_space<vmem>>, vector<16x32xf32>,
    %c0_i32_8 = arith.constant 0 : i32
    %9 = arith.cmpi eq, %arg1, %c0_i32_8 : i32
    %10 = arith.extui %9 : i1 to i32
    %c0_i32_9 = arith.constant 0 : i32
    %11 = arith.cmpi ne, %10, %c0_i32_9 : i32
    scf.if %11 {
      %c0_10 = arith.constant 0 : index
      %c0_11 = arith.constant 0 : index
      %12 = vector.load %arg7[%c0_10, %c0_11] : memref<16x32xf32, #tpu.memory_space<vmem>>, vector<16x32xf32>
      %c0_12 = arith.constant 0 : index
      %c0_13 = arith.constant 0 : index
      %13 = vector.load %arg4[%c0_12, %c0_13] : memref<1x32xf32, #tpu.memory_space<vmem>>, vector<1x32xf32>
      %14 = vector.broadcast %13 : vector<1x32xf32> to vector<16x32xf32>
      %15 = arith.addf %12, %14 : vector<16x32xf32>
      %16 = arith.negf %15 : vector<16x32xf32>
      %17 = math.exp %16 : vector<16x32xf32>
      %cst_14 = arith.constant 1.000000e+00 : f32
      %18 = vector.broadcast %cst_14 : f32 to vector<16x32xf32>
      %19 = arith.addf %18, %17 : vector<16x32xf32>
      %20 = arith.divf %18, %19 : vector<16x32xf32>
      %21 = arith.mulf %15, %20 : vector<16x32xf32>
      %22 = arith.mulf %21, %21 : vector<16x32xf32>
      %cst_15 = arith.constant dense<0.000000e+00> : vector<16xf32>
      %23 = vector.multi_reduction <add>, %22, %cst_15 [1] : vector<16x32xf32> to vector<16xf32>
      %24 = vector.shape_cast %23 : vector<16xf32> to vector<16x1xf32>
      %cst_16 = arith.constant 3.200000e+01 : f32
      %25 = vector.broadcast %cst_16 : f32 to vector<16x1xf32>
      %26 = arith.divf %24, %25 : vector<16x1xf32>
      %cst_17 = arith.constant 9.99999997E-7 : f32
      %27 = vector.broadcast %cst_17 : f32 to vector<16x1xf32>
      %28 = arith.addf %26, %27 : vector<16x1xf32>
      %29 = math.rsqrt %28 : vector<16x1xf32>
      %30 = vector.broadcast %29 : vector<16x1xf32> to vector<16x32xf32>
      %31 = arith.mulf %21, %30 : vector<16x32xf32>
      %c0_18 = arith.constant 0 : index
      %c0_19 = arith.constant 0 : index
      %32 = vector.load %arg5[%c0_18, %c0_19] : memref<1x32xf32, #tpu.memory_space<vmem>>, vector<1x32xf32>
      %33 = vector.broadcast %32 : vector<1x32xf32> to vector<16x32xf32>
      %34 = arith.mulf %31, %33 : vector<16x32xf32>
      %c0_20 = arith.constant 0 : index
      %c0_21 = arith.constant 0 : index
      %35 = vector.load %arg6[%c0_20, %c0_21] : memref<16x32xf32, #tpu.memory_space<vmem>>, vector<16x32xf32>
      tpu.vector_store %arg6[%c0_20, %c0_21], %34 {strides = array<i32>} : memref<16x32xf32, #tpu.memory_space<vmem>>, vector<16x32xf32>,
    } else {
    }
    return
  }
  func.func @transform_0(%arg0: i32, %arg1: i32) -> (i32, i32) {
    %c0_i32 = arith.constant 0 : i32
    return %arg0, %arg1 : i32, i32
  }
  func.func @transform_1(%arg0: i32, %arg1: i32) -> (i32, i32) {
    %c0_i32 = arith.constant 0 : i32
    %c0_i32_0 = arith.constant 0 : i32
    return %arg1, %c0_i32 : i32, i32
  }
  func.func @transform_2(%arg0: i32, %arg1: i32) -> (i32, i32) {
    %c0_i32 = arith.constant 0 : i32
    %c0_i32_0 = arith.constant 0 : i32
    %c0_i32_1 = arith.constant 0 : i32
    return %c0_i32, %c0_i32_0 : i32, i32
  }
  func.func @transform_3(%arg0: i32, %arg1: i32) -> (i32, i32) {
    %c0_i32 = arith.constant 0 : i32
    %c0_i32_0 = arith.constant 0 : i32
    %c0_i32_1 = arith.constant 0 : i32
    return %c0_i32, %c0_i32_0 : i32, i32
  }
  func.func @transform_4(%arg0: i32, %arg1: i32) -> (i32, i32) {
    %c0_i32 = arith.constant 0 : i32
    %c0_i32_0 = arith.constant 0 : i32
    return %arg0, %c0_i32 : i32, i32
  }
}

</mosaic_0001>

<llo_original>
// kernel: tpu_custom_call.1
$region0: #{tpu_custom_call.1}
  #allocation0 [shape = 'u32[]', space=smem, size = 0x4, offset = 0x4, fixed_abs, tag = 'smem constant byte address 0x4 - core index']
  #allocation1 [shape = 'u32[72,128]{1,0:T(1,128)}', space=vmem, size = 0x9000, scoped, tag = 'internal scratch']
  #allocation2 [shape = 'f32[16,32]{1,0:T(8,128)}', space=vmem, size = 0x2000, scoped, tag = 'scratch operand']
  %s0 = inlined_call_operand.hbm [shape: f32[32,32], index: 0, kind: input, shape index: {}]
  %s1 = inlined_call_operand.hbm [shape: f32[32,32], index: 1, kind: input, shape index: {}]
  %s2 = inlined_call_operand.vmem [shape: f32[1,32], index: 2, kind: input, shape index: {}]
  %s3 = inlined_call_operand.vmem [shape: f32[1,32], index: 3, kind: input, shape index: {}]
  %s4 = inlined_call_operand.hbm [shape: f32[32,32], index: 4, kind: output, shape index: {}]
  %s5 = sld [smem:[#allocation0]]
  $region65: #{tpu_custom_call.1} parent=0
    _
  %s7 = ssub.s32 1, %s5
  %s8 = scalar_select 0, %s7, %s5
  $region1: #{tpu_custom_call.1} parent=0
    #allocation3 [shape = 'u8[16384]{0}', space=vmem, size = 0x4000, scoped, tag = 'input window, operand 0']
    #allocation4 [shape = 's32[2]{0}', space=sflag, size = 0x8, scoped, tag = 'scoped memory for tpu_custom_call.1']
    #allocation5 [shape = 's32[2]{0}', space=sflag, size = 0x8, scoped, tag = 'scoped memory for tpu_custom_call.1']
    #allocation6 [shape = 'u8[16384]{0}', space=vmem, size = 0x4000, scoped, tag = 'input window, operand 1, single buffered']
    #allocation7 [shape = 's32[1]{0}', space=sflag, size = 0x4, scoped, tag = 'scoped memory for tpu_custom_call.1']
    #allocation8 [shape = 'u8[16384]{0}', space=vmem, size = 0x4000, scoped, tag = 'output window, operand 0']
    %9 = vsyncpa [#allocation4], 0
    %s10 = scalar_lea.sflag [#allocation4], 1
    %11 = vsyncpa %s10, 0
    %12 = vsyncpa [#allocation7], 0
    %13 = vsyncpa [#allocation5], 0
    %s14 = scalar_lea.sflag [#allocation5], 1
    %15 = vsyncpa %s14, 0
    loop: start=0, step=1, limit=4
    $region2: #{tpu_custom_call.1} parent=1 // loop_pre_header
      _
    $region3: #{tpu_custom_call.1} parent=1 // loop_header
      %s17 = sphi 0, %s21
      %p18 = scmp.ge.s32.totalorder %s17, 4
      %s24 = sphi 0, %s36
      %s25 = sphi 0, %s32
      %s26 = sphi 0, %s24
      %s27 = sphi 0, %s25
      %s28 = sphi 0, %s26
      %s29 = sphi 0, %s27
      %s41 = sphi 0, %s43
      %s44 = sphi 0, %s41
      %s45 = sphi 0, %s44
      %s61 = sphi 0, %s45
      %s67 = sphi 0, %s69
      %s70 = sphi 0, %s67
      %s71 = sphi 0, %s70
      %s87 = sphi 0, %s71
      %s91 = sphi 0, %s91
      %s93 = sphi 0, %s91
      %s94 = sphi 0, %s93
      %s108 = sphi 0, %s94
      %s112 = sphi 0, %s112
      %s114 = sphi 0, %s112
      %s115 = sphi 0, %s114
      %s129 = sphi 0, %s115
      %s135 = sphi 0, %s137
      %s138 = sphi 0, %s135
      %s139 = sphi 0, %s138
      %s155 = sphi 0, %s139
    $region4: #{tpu_custom_call.1} parent=1 // loop_header_branch
      %20 = sbr.rel (%p18) target = $region8
    $region5: #{tpu_custom_call.1} parent=1 // loop_body
      %s22 = ssub.s32 %s17, 1
      %s23 = ssub.s32 %s17, 2
      %s30 = sadd.s32 1, %s25
      %p31 = scmp.ge.s32.totalorder %s30, 1
      %s32 = scalar_select %p31, 0, %s30
      %s33 = sadd.s32 1, %s24
      %s34 = scalar_select %p31, %s33, %s24
      %p35 = scmp.ge.s32.totalorder %s34, 2
      %s36 = scalar_select %p35, 0, %s34
      %s37 = ssub.s32 %s24, %s36
      %s38 = ssub.s32 %s25, %s32
      %s39 = sor.u32 %s37, %s38
      %p40 = scmp.eq.s32.totalorder %s39, 0
      %s42 = sadd.s32 %s41, 1
      %s43 = scalar_select %p40, %s41, %s42
      %p46 = pneg %p40
      %p47 = scmp.eq.s32.totalorder %s17, 1
      %p48 = por %p46, %p47
      %p49 = scmp.ne.s32.totalorder %s41, %s44
      %p50 = scmp.eq.s32.totalorder %s17, 0
      %p51 = por %p49, %p50
      %p52 = scmp.ne.s32.totalorder %s41, %s44
      %p53 = scmp.eq.s32.totalorder %s22, 1
      %p54 = por %p52, %p53
      %p55 = scmp.ne.s32.totalorder %s44, %s45
      %p56 = scmp.eq.s32.totalorder %s22, 0
      %p57 = por %p55, %p56
      %p58 = scmp.ne.s32.totalorder %s44, %s45
      %p59 = scmp.eq.s32.totalorder %s23, 1
      %p60 = por %p58, %p59
      %p62 = scmp.ne.s32.totalorder %s45, %s61
      %p63 = scmp.eq.s32.totalorder %s23, 0
      %p64 = por %p62, %p63
      %s65 = ssub.s32 %s25, %s32
      %p66 = scmp.eq.s32.totalorder %s65, 0
      %s68 = sadd.s32 %s67, 1
      %s69 = scalar_select %p66, %s67, %s68
      %p72 = pneg %p66
      %p73 = scmp.eq.s32.totalorder %s17, 1
      %p74 = por %p72, %p73
      %p75 = scmp.ne.s32.totalorder %s67, %s70
      %p76 = scmp.eq.s32.totalorder %s17, 0
      %p77 = por %p75, %p76
      %p78 = scmp.ne.s32.totalorder %s67, %s70
      %p79 = scmp.eq.s32.totalorder %s22, 1
      %p80 = por %p78, %p79
      %p81 = scmp.ne.s32.totalorder %s70, %s71
      %p82 = scmp.eq.s32.totalorder %s22, 0
      %p83 = por %p81, %p82
      %p84 = scmp.ne.s32.totalorder %s70, %s71
      %p85 = scmp.eq.s32.totalorder %s23, 1
      %p86 = por %p84, %p85
      %p88 = scmp.ne.s32.totalorder %s71, %s87
      %p89 = scmp.eq.s32.totalorder %s23, 0
      %p90 = por %p88, %p89
      %s92 = sadd.s32 %s91, 1
      %p95 = scmp.eq.s32.totalorder %s17, 1
      %p96 = scmp.ne.s32.totalorder %s91, %s93
      %p97 = scmp.eq.s32.totalorder %s17, 0
      %p98 = por %p96, %p97
      %p99 = scmp.ne.s32.totalorder %s91, %s93
      %p100 = scmp.eq.s32.totalorder %s22, 1
      %p101 = por %p99, %p100
      %p102 = scmp.ne.s32.totalorder %s93, %s94
      %p103 = scmp.eq.s32.totalorder %s22, 0
      %p104 = por %p102, %p103
      %p105 = scmp.ne.s32.totalorder %s93, %s94
      %p106 = scmp.eq.s32.totalorder %s23, 1
      %p107 = por %p105, %p106
      %p109 = scmp.ne.s32.totalorder %s94, %s108
      %p110 = scmp.eq.s32.totalorder %s23, 0
      %p111 = por %p109, %p110
      %s113 = sadd.s32 %s112, 1
      %p116 = scmp.eq.s32.totalorder %s17, 1
      %p117 = scmp.ne.s32.totalorder %s112, %s114
      %p118 = scmp.eq.s32.totalorder %s17, 0
      %p119 = por %p117, %p118
      %p120 = scmp.ne.s32.totalorder %s112, %s114
      %p121 = scmp.eq.s32.totalorder %s22, 1
      %p122 = por %p120, %p121
      %p123 = scmp.ne.s32.totalorder %s114, %s115
      %p124 = scmp.eq.s32.totalorder %s22, 0
      %p125 = por %p123, %p124
      %p126 = scmp.ne.s32.totalorder %s114, %s115
      %p127 = scmp.eq.s32.totalorder %s23, 1
      %p128 = por %p126, %p127
      %p130 = scmp.ne.s32.totalorder %s115, %s129
      %p131 = scmp.eq.s32.totalorder %s23, 0
      %p132 = por %p130, %p131
      %s133 = ssub.s32 %s24, %s36
      %p134 = scmp.eq.s32.totalorder %s133, 0
      %s136 = sadd.s32 %s135, 1
      %s137 = scalar_select %p134, %s135, %s136
      %p140 = pneg %p134
      %p141 = scmp.eq.s32.totalorder %s17, 1
      %p142 = por %p140, %p141
      %p143 = scmp.ne.s32.totalorder %s135, %s138
      %p144 = scmp.eq.s32.totalorder %s17, 0
      %p145 = por %p143, %p144
      %p146 = scmp.ne.s32.totalorder %s135, %s138
      %p147 = scmp.eq.s32.totalorder %s22, 1
      %p148 = por %p146, %p147
      %p149 = scmp.ne.s32.totalorder %s138, %s139
      %p150 = scmp.eq.s32.totalorder %s22, 0
      %p151 = por %p149, %p150
      %p152 = scmp.ne.s32.totalorder %s138, %s139
      %p153 = scmp.eq.s32.totalorder %s23, 1
      %p154 = por %p152, %p153
      %p156 = scmp.ne.s32.totalorder %s139, %s155
      %p157 = scmp.eq.s32.totalorder %s23, 0
      %p158 = por %p156, %p157
      %p159 = scmp.le.s32.totalorder 1, %s17
      %p160 = scmp.lt.s32.totalorder %s17, 3
      %p161 = pnand %p159, %p160
      %p162 = pneg %p161
      // Predicated region
      $region9: #{tpu_custom_call.1} parent=5 // pred_check
        _
      $region10: #{tpu_custom_call.1} parent=5 // pred_check_branch
        %164 = sbr.rel (%p161) target = $region12
      $region11: #{tpu_custom_call.1} parent=5 // pred_region
        %s165 = ssub.s32 %s17, 1
        // Predicated region
        $region13: #{tpu_custom_call.1} parent=11 // pred_check
          %p166 = pneg %p83
        $region14: #{tpu_custom_call.1} parent=11 // pred_check_branch
          %168 = sbr.rel (%p166) target = $region16
        $region15: #{tpu_custom_call.1} parent=11 // pred_region
          %s169 = smul.u32 4, %s27
          %171 = vsyncadd [#allocation7], 0
          %s172 = smul.addr %s169, 8
          %s173 = scalar_lea.hbm %s1, %s172
          %s174 = sshll.u32 %s173, 4
          %s175 = int_to_ptr.hbm [resolvable:$true] %s174
          %s176 = sshll.u32 [#allocation6], 4
          %s177 = int_to_ptr.vmem [resolvable:$true] %s176
          %182 = dma.hbm_to_vmem [thread:$0]  %s175, 512, %s177, [#allocation7], 128, 128, 8
        $region16: #{tpu_custom_call.1} parent=11 // pred_fallthru
          _
        // Predicated region
        $region17: #{tpu_custom_call.1} parent=11 // pred_check
          %p183 = pneg %p104
        $region18: #{tpu_custom_call.1} parent=11 // pred_check_branch
          %185 = sbr.rel (%p183) target = $region20
        $region19: #{tpu_custom_call.1} parent=11 // pred_region
          _
        $region20: #{tpu_custom_call.1} parent=11 // pred_fallthru
          _
        // Predicated region
        $region21: #{tpu_custom_call.1} parent=11 // pred_check
          %p186 = pneg %p125
        $region22: #{tpu_custom_call.1} parent=11 // pred_check_branch
          %188 = sbr.rel (%p186) target = $region24
        $region23: #{tpu_custom_call.1} parent=11 // pred_region
          _
        $region24: #{tpu_custom_call.1} parent=11 // pred_fallthru
          _
      $region12: #{tpu_custom_call.1} parent=5 // pred_fallthru
        _
      %p189 = scmp.lt.s32.totalorder %s17, 2
      // Predicated region
      $region25: #{tpu_custom_call.1} parent=5 // pred_check
        %p190 = pneg %p189
      $region26: #{tpu_custom_call.1} parent=5 // pred_check_branch
        %192 = sbr.rel (%p190) target = $region28
      $region27: #{tpu_custom_call.1} parent=5 // pred_region
        // Predicated region
        $region29: #{tpu_custom_call.1} parent=27 // pred_check
          %p193 = pneg %p51
        $region30: #{tpu_custom_call.1} parent=27 // pred_check_branch
          %195 = sbr.rel (%p193) target = $region32
        $region31: #{tpu_custom_call.1} parent=27 // pred_region
          %s196 = sand.u32 %s41, 1
          %s197 = scalar_lea.sflag [#allocation4], %s196
          %s198 = sand.u32 %s41, 1
          %s199 = smul.addr %s198, 16
          %s200 = scalar_lea.vmem [#allocation3], %s199
          %s201 = smul.u32 2, %s24
          %203 = vsyncadd %s197, 0
          %s204 = sadd.s32 %s25, %s201
          %s205 = smul.addr %s204, 8
          %s206 = scalar_lea.hbm %s0, %s205
          %s207 = sshll.u32 %s206, 4
          %s208 = int_to_ptr.hbm [resolvable:$true] %s207
          %s209 = sshll.u32 %s200, 4
          %s210 = int_to_ptr.vmem [resolvable:$true] %s209
          %215 = dma.hbm_to_vmem [thread:$0]  %s208, 256, %s210, %s197, 128, 128, 8
        $region32: #{tpu_custom_call.1} parent=27 // pred_fallthru
          _
      $region28: #{tpu_custom_call.1} parent=5 // pred_fallthru
        _
      %p216 = scmp.le.s32.totalorder 1, %s17
      %p217 = scmp.lt.s32.totalorder %s17, 3
      %p218 = pnand %p216, %p217
      %p219 = pneg %p218
      // Predicated region
      $region33: #{tpu_custom_call.1} parent=5 // pred_check
        _
      $region34: #{tpu_custom_call.1} parent=5 // pred_check_branch
        %221 = sbr.rel (%p218) target = $region36
      $region35: #{tpu_custom_call.1} parent=5 // pred_region
        %s222 = ssub.s32 %s17, 1
        %s223 = sand.u32 %s44, 1
        %s224 = scalar_lea.sflag [#allocation4], %s223
        %s225 = sand.u32 %s44, 1
        %s226 = smul.addr %s225, 16
        %s227 = scalar_lea.vmem [#allocation3], %s226
        // Predicated region
        $region37: #{tpu_custom_call.1} parent=35 // pred_check
          %p228 = pneg %p57
        $region38: #{tpu_custom_call.1} parent=35 // pred_check_branch
          %230 = sbr.rel (%p228) target = $region40
        $region39: #{tpu_custom_call.1} parent=35 // pred_region
          %232 = dma.done %s224, 256
        $region40: #{tpu_custom_call.1} parent=35 // pred_fallthru
          _
        // Predicated region
        $region41: #{tpu_custom_call.1} parent=35 // pred_check
          %p233 = pneg %p83
        $region42: #{tpu_custom_call.1} parent=35 // pred_check_branch
          %235 = sbr.rel (%p233) target = $region44
        $region43: #{tpu_custom_call.1} parent=35 // pred_region
          %237 = dma.done [#allocation7], 512
        $region44: #{tpu_custom_call.1} parent=35 // pred_fallthru
          _
        %s238 = sand.u32 %s44, 1
        %s239 = scalar_lea.sflag [#allocation4], %s238
        %s240 = sand.u32 %s44, 1
        %s241 = smul.addr %s240, 16
        %s242 = scalar_lea.vmem [#allocation3], %s241
        %p243 = pneg %p57
        %p244 = pneg %p54
        %p245 = pneg %p83
        %p246 = pneg %p80
        %p247 = pneg %p104
        %p248 = pneg %p101
        %p249 = pneg %p125
        %p250 = pneg %p122
        %p251 = pneg %p151
        %p252 = pneg %p148
        %s253 = sand.u32 %s138, 1
        %s254 = scalar_lea.sflag [#allocation5], %s253
        %s255 = sand.u32 %s138, 1
        %s256 = smul.addr %s255, 16
        %s257 = scalar_lea.vmem [#allocation8], %s256
        %s258 = smul.u32 2, %s26
        %s259 = smul.u32 4, %s27
        %s260 = smul.u32 2, %s26
        %p261 = scmp.eq.s32.totalorder %s27, 0
        // Predicated region
        $region45: #{tpu_custom_call.1} parent=35 // pred_check
          %p262 = pneg %p261
        $region46: #{tpu_custom_call.1} parent=35 // pred_check_branch
          %264 = sbr.rel (%p262) target = $region48
        $region47: #{tpu_custom_call.1} parent=35 // pred_region
          %vm265 = vcmask 261120
          %266 = vst.msk [vmem:[#allocation2] sm:$0xff] %vm265, 0.0
          %267 = vst.msk [vmem:[#allocation2 + $0x8] sm:$0xff] %vm265, 0.0
        $region48: #{tpu_custom_call.1} parent=35 // pred_fallthru
          _
        %v268 = vld [vmem:[#allocation2] sm:$0xff]
        %v269 = vld [vmem:[#allocation2 + $0x8] sm:$0xff]
        %v270 = vld [vmem:[%s227] sm:$0xff]
        %v271 = vld [vmem:[%s227 + $0x8] sm:$0xff]
        %v272 = vld [vmem:[#allocation6] sm:$0xff]
        %v273 = vld [vmem:[#allocation6 + $0x8] sm:$0xff]
        %v274 = vld [vmem:[#allocation6 + $0x10] sm:$0xff]
        %v275 = vld [vmem:[#allocation6 + $0x18] sm:$0xff]
        %vm276 = vcmask 261120
        %v278 = vsel %vm276, %v270, 0
        %v281 = vsel %vm276, %v271, 0
        %283 = vmatpush.msra.mxu0 0.0
        %284 = vmatpush.msra.mxu0 0.0
        %285 = vmatpush.msra.mxu0 0.0
        %286 = vmatpush.msra.mxu0 0.0
        %287 = vmatpush.msra.mxu0 0.0
        %288 = vmatpush.msra.mxu0 0.0
        %289 = vmatpush.msra.mxu0 0.0
        %290 = vmatpush.msra.mxu0 0.0
        %291 = vmatpush.msra.mxu0 0.0
        %292 = vmatpush.msra.mxu0 0.0
        %293 = vmatpush.msra.mxu0 0.0
        %294 = vmatpush.msra.mxu0 0.0
        %295 = vmatpush.msra.mxu0 %v275
        %296 = vmatpush.msra.mxu0 %v274
        %297 = vmatpush.msra.mxu0 %v273
        %298 = vmatpush.msra.mxu0 %v272
        %299 = vmatmul.f32.gmra.mxu0 %v278
        %v300 = vpop.f32.mrf.mxu0
        %v301 = vadd.f32 0.0, %v300
        %302 = vmatmul.f32.gmra.mxu0 %v281
        %v303 = vpop.f32.mrf.mxu0
        %v304 = vadd.f32 0.0, %v303
        %305 = vdwg.mxu0
        %v306 = vadd.f32 %v268, %v301
        %v307 = vadd.f32 %v269, %v304
        %308 = vst.msk [vmem:[#allocation2] sm:$0xff] %vm276, %v306
        %309 = vst.msk [vmem:[#allocation2 + $0x8] sm:$0xff] %vm276, %v307
        // Predicated region
        $region49: #{tpu_custom_call.1} parent=35 // pred_check
          %p310 = pneg %p261
        $region50: #{tpu_custom_call.1} parent=35 // pred_check_branch
          %312 = sbr.rel (%p310) target = $region52
        $region51: #{tpu_custom_call.1} parent=35 // pred_region
          %v313 = vld [vmem:[#allocation2] sm:$0xff]
          %v314 = vld [vmem:[#allocation2 + $0x8] sm:$0xff]
          %v315 = vld [vmem:[%s2] sm:$0x1]
          %v317 = vperm.slane %v315, 0
          %v319 = vadd.f32 %v313, %v317
          %v320 = vadd.f32 %v314, %v317
          %v321 = vxor.u32 %v319, 2147483648
          %v322 = vxor.u32 %v320, 2147483648
          %v323 = vmul.f32 %v321, 1.442695
          %v324 = vpow.pop %v323
          %v325 = vmul.f32 %v322, 1.442695
          %v326 = vpow.pop %v325
          %v327 = vadd.f32 %v324, 1.0
          %v328 = vadd.f32 %v326, 1.0
          %v329 = vrcp.pop %v327
          %v330 = vmul.f32 %v327, %v329
          %v331 = vsub.f32 1.0, %v330
          %v332 = vmul.f32 %v329, %v331
          %v333 = vadd.f32 %v329, %v332
          %vm334 = vweird.f32 %v327
          %vm335 = vweird.f32 %v329
          %vm336 = vmor %vm334, %vm335
          %v337 = vsel %vm336, %v329, %v333
          %v338 = vand.u32 2147483647, %v327
          %vm339 = vcmp.eq.f32.partialorder %v338, 8.507059e+37
          %v340 = vand.u32 %v327, 2147483648
          %v341 = vor.u32 1.1754944e-38, %v340
          %v342 = vsel %vm339, %v341, %v337
          %v343 = vmul.f32 1.0, %v342
          %v344 = vrcp.pop %v328
          %v345 = vmul.f32 %v328, %v344
          %v346 = vsub.f32 1.0, %v345
          %v347 = vmul.f32 %v344, %v346
          %v348 = vadd.f32 %v344, %v347
          %vm349 = vweird.f32 %v328
          %vm350 = vweird.f32 %v344
          %vm351 = vmor %vm349, %vm350
          %v352 = vsel %vm351, %v344, %v348
          %v353 = vand.u32 2147483647, %v328
          %vm354 = vcmp.eq.f32.partialorder %v353, 8.507059e+37
          %v355 = vand.u32 %v328, 2147483648
          %v356 = vor.u32 1.1754944e-38, %v355
          %v357 = vsel %vm354, %v356, %v352
          %v358 = vmul.f32 1.0, %v357
          %v359 = vmul.f32 %v319, %v343
          %v360 = vmul.f32 %v320, %v358
          %v361 = vmul.f32 %v359, %v359
          %v362 = vmul.f32 %v360, %v360
          %v363 = vsel %vm276, %v361, 0.0
          %364 = vadd.xlane.f32.xlu0 %v363
          %v365 = vpop.xlane.xlu0 %364
          %v366 = vsel %vm276, %v362, 0.0
          %367 = vadd.xlane.f32.xlu0 %v366
          %v368 = vpop.xlane.xlu0 %367
          %v369 = vrcp.pop 32.0
          %v370 = vmul.f32 32.0, %v369
          %v371 = vsub.f32 1.0, %v370
          %v372 = vmul.f32 %v369, %v371
          %v373 = vadd.f32 %v369, %v372
          %vm374 = vweird.f32 %v369
          %v375 = vsel %vm374, %v369, %v373
          %v376 = vmul.f32 %v365, %v375
          %v377 = vmul.f32 %v368, %v375
          %v378 = vadd.f32 %v376, 1e-06
          %v379 = vadd.f32 %v377, 1e-06
          %v380 = vrsqrt.pop %v378
          %v381 = vmul.f32 %v380, %v378
          %v382 = vmul.f32 %v381, %v380
          %v383 = vmul.f32 0.5, %v382
          %v384 = vsub.f32 1.5, %v383
          %v385 = vmul.f32 %v380, %v384
          %vm386 = vweird.f32 %v378
          %vm387 = vweird.f32 %v380
          %vm388 = vmor %vm386, %vm387
          %v389 = vsel %vm388, %v380, %v385
          %v390 = vrsqrt.pop %v379
          %v391 = vmul.f32 %v390, %v379
          %v392 = vmul.f32 %v391, %v390
          %v393 = vmul.f32 0.5, %v392
          %v394 = vsub.f32 1.5, %v393
          %v395 = vmul.f32 %v390, %v394
          %vm396 = vweird.f32 %v379
          %vm397 = vweird.f32 %v390
          %vm398 = vmor %vm396, %vm397
          %v399 = vsel %vm398, %v390, %v395
          %v400 = vmul.f32 %v359, %v389
          %v401 = vmul.f32 %v360, %v399
          %v402 = vld [vmem:[%s3] sm:$0x1]
          %v404 = vperm.slane %v402, 0
          %v406 = vmul.f32 %v400, %v404
          %v407 = vmul.f32 %v401, %v404
          %408 = vst.msk [vmem:[%s257] sm:$0xff] %vm276, %v406
          %409 = vst.msk [vmem:[%s257 + $0x8] sm:$0xff] %vm276, %v407
        $region52: #{tpu_custom_call.1} parent=35 // pred_fallthru
          _
        %s410 = sand.u32 %s138, 1
        %s411 = scalar_lea.sflag [#allocation5], %s410
        %s412 = sand.u32 %s138, 1
        %s413 = smul.addr %s412, 16
        %s414 = scalar_lea.vmem [#allocation8], %s413
        // Predicated region
        $region53: #{tpu_custom_call.1} parent=35 // pred_check
          %p415 = pneg %p148
        $region54: #{tpu_custom_call.1} parent=35 // pred_check_branch
          %417 = sbr.rel (%p415) target = $region56
        $region55: #{tpu_custom_call.1} parent=35 // pred_region
          %s418 = smul.u32 2, %s26
          %420 = vsyncadd %s411, 0
          %s421 = smul.addr %s418, 8
          %s422 = scalar_lea.hbm %s4, %s421
          %s423 = sshll.u32 %s414, 4
          %s424 = int_to_ptr.vmem [resolvable:$true] %s423
          %s425 = sshll.u32 %s422, 4
          %s426 = int_to_ptr.hbm [resolvable:$true] %s425
          %431 = dma.vmem_to_hbm [thread:$0]  %s424, 256, %s426, %s411, 128, 128, 8
        $region56: #{tpu_custom_call.1} parent=35 // pred_fallthru
          _
      $region36: #{tpu_custom_call.1} parent=5 // pred_fallthru
        _
      %p432 = scmp.le.s32.totalorder 2, %s17
      // Predicated region
      $region57: #{tpu_custom_call.1} parent=5 // pred_check
        %p433 = pneg %p432
      $region58: #{tpu_custom_call.1} parent=5 // pred_check_branch
        %435 = sbr.rel (%p433) target = $region60
      $region59: #{tpu_custom_call.1} parent=5 // pred_region
        %s436 = ssub.s32 %s17, 2
        // Predicated region
        $region61: #{tpu_custom_call.1} parent=59 // pred_check
          %p437 = pneg %p154
        $region62: #{tpu_custom_call.1} parent=59 // pred_check_branch
          %439 = sbr.rel (%p437) target = $region64
        $region63: #{tpu_custom_call.1} parent=59 // pred_region
          %s440 = sand.u32 %s139, 1
          %s441 = scalar_lea.sflag [#allocation5], %s440
          %s442 = sand.u32 %s139, 1
          %s443 = smul.addr %s442, 16
          %s444 = scalar_lea.vmem [#allocation8], %s443
          %446 = dma.done %s441, 256
        $region64: #{tpu_custom_call.1} parent=59 // pred_fallthru
          _
      $region60: #{tpu_custom_call.1} parent=5 // pred_fallthru
        _
    $region6: #{tpu_custom_call.1} parent=1 // loop_footer
      %s21 = sadd.s32 1, %s17
    $region7: #{tpu_custom_call.1} parent=1 // loop_footer_branch
      %16 = sbr.rel target = $region3
    $region8: #{tpu_custom_call.1} parent=1 // loop_exit
      _
    %447 = vsyncpa [#allocation4], 1
    %s448 = scalar_lea.sflag [#allocation4], 1
    %449 = vsyncpa %s448, 1
    %450 = vsyncpa [#allocation7], 1
    %451 = vsyncpa [#allocation5], 1
    %s452 = scalar_lea.sflag [#allocation5], 1
    %453 = vsyncpa %s452, 1

</llo_original>
